<compile_context>
chip_gen: v6e
topology: v6e:2x2x1
jax: 0.10.0
libtpu: 0.0.40
codegen_flags: <defaults>
</compile_context>

<pallas_src>
import math

import jax
import jax.numpy as jnp
from jax import lax
from jax.experimental import pallas as pl
from jax.experimental.pallas import tpu as pltpu


_DMA_INFLIGHT = 8          # row DMAs kept in flight on the HBM-gather path
_VMEM_SLACK = 2 << 20      # misc slack in the VMEM budget


def _round_up(x, m):
    return ((x + m - 1) // m) * m


# ---------------------------------------------------------------------------
# Kernels
# ---------------------------------------------------------------------------
def _make_resident_kernel(tq, unroll):
    """Token table fully resident in VMEM: gather rows + dense positional add."""

    def kernel(ids_ref, tok_ref, pos_ref, out_ref):
        # ids_ref : SMEM (B*S_pad,) int32 token ids (scalar prefetch, flat).
        # tok_ref : VMEM (V, E)     token table (resident across the grid).
        # pos_ref : VMEM (S_pad, E) positional table (resident).
        # out_ref : VMEM (TQ, E)    output block.
        sc = pl.program_id(0)
        b = pl.program_id(1)
        s_pad = pl.num_programs(0) * tq
        base = pl.multiple_of(b * s_pad + sc * tq, 8)
        pos_lo = pl.multiple_of(sc * tq, 8)

        def gather_row(j, carry):
            tid = ids_ref[base + j]            # scalar read from SMEM
            out_ref[j, :] = tok_ref[tid, :]    # dynamic row gather inside VMEM
            return carry

        # Partially unrolled so the LLO scheduler can overlap several row
        # copies per iteration instead of a serial sld->vld->vst chain.
        lax.fori_loop(0, tq, gather_row, 0, unroll=unroll)

        # One lane/sublane-dense VPU add + store for the whole chunk.
        out_ref[...] = (out_ref[...] + pos_ref[pl.ds(pos_lo, tq), :]
                        ).astype(out_ref.dtype)

    return kernel


def _make_hbm_gather_kernel(tq, inflight):
    """Token table stays in HBM: pipelined per-row async-DMA gather."""

    def kernel(ids_ref, tok_hbm, pos_ref, out_ref, sems):
        sc = pl.program_id(0)
        b = pl.program_id(1)
        s_pad = pl.num_programs(0) * tq
        base = b * s_pad + sc * tq
        pos_lo = pl.multiple_of(sc * tq, 8)

        def start_row(j, slot):
            tid = ids_ref[base + j]
            pltpu.make_async_copy(tok_hbm.at[tid], out_ref.at[j],
                                  sems.at[slot]).start()

        def wait_row(j, slot):
            # Any src index of matching shape is fine for the wait descriptor.
            pltpu.make_async_copy(tok_hbm.at[0], out_ref.at[j],
                                  sems.at[slot]).wait()

        # Prime the ring: `inflight` row DMAs in flight at all times.
        def prime(j, c):
            start_row(j, j)
            return c

        lax.fori_loop(0, inflight, prime, 0, unroll=True)

        # Steady state: retire row j, immediately launch row j + inflight on
        # the freed semaphore slot, so HBM latency stays hidden.
        def steady(j, c):
            slot = j % inflight
            wait_row(j, slot)

            @pl.when(j + inflight < tq)
            def _():
                start_row(j + inflight, slot)

            return c

        lax.fori_loop(0, tq, steady, 0)

        out_ref[...] = (out_ref[...] + pos_ref[pl.ds(pos_lo, tq), :]
                        ).astype(out_ref.dtype)

    return kernel


# ---------------------------------------------------------------------------
# Wrapper
# ---------------------------------------------------------------------------
def bert_embedding_forward(sequence, token_table, pos_table, *, tq=None,
                           force_hbm_gather=False):
    """Forward of BERTEmbedding: token_emb[sequence] + pe[:S]; dropout=identity."""
    B, S = sequence.shape
    V, E = token_table.shape
    dtype = token_table.dtype
    itemsize = dtype.itemsize

    # Cast positional table to the output dtype so the in-kernel add/store is
    # dtype-consistent (pos is built in f32; token table may be bf16).
    pos_table = pos_table.astype(dtype)
    max_len = pos_table.shape[0]

    # Physical VMEM of this generation (64 MiB per core on v7x, 128 MiB v5e/v6e).
    try:
        phys_vmem = int(getattr(pltpu.get_tpu_info(), "vmem_capacity_bytes",
                                64 * 1024 * 1024))
    except Exception:  # pragma: no cover - conservative default
        phys_vmem = 64 * 1024 * 1024

    # Tokens per grid step.  Larger chunks amortize per-step pipeline overhead
    # and make each output writeback a bigger dense DMA; stay moderate on the
    # 64 MiB generation where a resident table is tight.
    if tq is None:
        tq = 512 if phys_vmem >= (96 << 20) else 256
    tq = min(_round_up(tq, 8), _round_up(S, 8))
    num_chunks = _round_up(S, tq) // tq
    s_pad = num_chunks * tq

    # Flat int32 ids for SMEM (1-D avoids the 8x128 padding of 2-D SMEM).
    ids = sequence.astype(jnp.int32)
    if s_pad != S:
        # Padded slots gather table row 0 and are sliced off below; any valid
        # token id works (row 0 also happens to be the padding_idx row).
        ids = jnp.pad(ids, ((0, 0), (0, s_pad - S)))
    ids = ids.reshape(-1)

    # Positional table trimmed/padded to exactly S_pad rows -> resident block.
    if s_pad > max_len:
        pos_table = jnp.pad(pos_table, ((0, s_pad - max_len), (0, 0)))
    elif s_pad < max_len:
        pos_table = pos_table[:s_pad]

    table_bytes = V * E * itemsize
    pos_bytes = s_pad * E * itemsize
    block_bytes = tq * E * itemsize
    out_bytes = B * s_pad * E * itemsize

    def _call(single_buffer):
        bufs = 1 if single_buffer else 2
        resident_need = (bufs * table_bytes + bufs * pos_bytes
                         + 2 * block_bytes + _VMEM_SLACK)
        fits_vmem = ((not force_hbm_gather)
                     and resident_need <= int(0.8 * phys_vmem))

        def _const_spec(shape):
            idx = lambda s, b, ids_ref: (0,) * len(shape)
            if single_buffer:
                # Constant index_map -> never refetched; one buffer is enough.
                return pl.BlockSpec(shape, idx, pipeline_mode=pl.Buffered(1))
            return pl.BlockSpec(shape, idx)

        pos_spec = _const_spec((s_pad, E))
        out_spec = pl.BlockSpec((None, tq, E), lambda s, b, ids_ref: (b, s, 0))

        if fits_vmem:
            kernel = _make_resident_kernel(tq, unroll=min(8, tq))
            tok_spec = _const_spec((V, E))
            scratch = []
            vmem_need = resident_need
            bytes_accessed = ids.size * 4 + table_bytes + pos_bytes + out_bytes
        else:
            inflight = min(_DMA_INFLIGHT, tq)
            kernel = _make_hbm_gather_kernel(tq, inflight)
            tok_spec = pl.BlockSpec(memory_space=pl.ANY)  # stays in HBM
            scratch = [pltpu.SemaphoreType.DMA((inflight,))]
            vmem_need = bufs * pos_bytes + 2 * block_bytes + _VMEM_SLACK
            bytes_accessed = ids.size * 4 + out_bytes + pos_bytes + out_bytes

        vmem_limit = int(min(int(0.9 * phys_vmem), max(vmem_need, 8 << 20)))
        cost = pl.CostEstimate(flops=B * s_pad * E, transcendentals=0,
                               bytes_accessed=int(bytes_accessed))

        return pl.pallas_call(
            kernel,
            out_shape=jax.ShapeDtypeStruct((B, s_pad, E), dtype),
            grid_spec=pltpu.PrefetchScalarGridSpec(
                num_scalar_prefetch=1,
                grid=(num_chunks, B),      # chunks first -> megacore-friendly
                in_specs=[tok_spec, pos_spec],
                out_specs=out_spec,
                scratch_shapes=scratch,
            ),
            compiler_params=pltpu.CompilerParams(
                dimension_semantics=("parallel", "parallel"),
                vmem_limit_bytes=vmem_limit),
            cost_estimate=cost,
        )(ids, token_table, pos_table)

    try:
        out = _call(single_buffer=True)
    except Exception:
        # pipeline_mode=pl.Buffered(1) unsupported on this jax version: retry
        # with default (double-buffered) specs; the VMEM budget is re-derived,
        # which may route very large tables onto the async HBM-gather path.
        out = _call(single_buffer=False)

    if s_pad != S:
        out = out[:, :S, :]
    return out


# ---------------------------------------------------------------------------
# Parameter constructors (match the PyTorch module)
# ---------------------------------------------------------------------------
def make_positional_table(max_len, d_model):
    """Sinusoidal positional embedding, identical to PyTorch PositionalEmbedding."""
    position = jnp.arange(max_len, dtype=jnp.float32)[:, None]
    div_term = jnp.exp(
        jnp.arange(0, d_model, 2, dtype=jnp.float32) * -(math.log(10000.0) / d_model)
    )
    pe = jnp.zeros((max_len, d_model), dtype=jnp.float32)
    pe = pe.at[:, 0::2].set(jnp.sin(position * div_term))
    pe = pe.at[:, 1::2].set(jnp.cos(position * div_term))
    return pe


def make_token_table(key, vocab_size, embed_size):
    """nn.Embedding(vocab_size, embed_size, padding_idx=0)-style weights."""
    w = jax.random.normal(key, (vocab_size, embed_size), dtype=jnp.float32)
    w = w.at[0].set(0.0)  # padding_idx=0 row is zeros
    return w


if __name__ == "__main__":
    # Small shapes consistent with the module.
    B, S = 2, 8
    vocab_size, embed_size, max_len = 64, 32, 512

    key = jax.random.PRNGKey(0)
    k_tok, k_seq = jax.random.split(key)

    token_table = make_token_table(k_tok, vocab_size, embed_size)
    pos_table = make_positional_table(max_len, embed_size)
    sequence = jax.random.randint(k_seq, (B, S), 0, vocab_size, dtype=jnp.int32)

    ref = token_table[sequence] + pos_table[:S][None, :, :]

    # 1) Default (VMEM-resident table) path.
    out = jax.block_until_ready(
        bert_embedding_forward(sequence, token_table, pos_table))
    assert out.shape == (B, S, embed_size)
    assert jnp.allclose(out, ref, atol=1e-6, rtol=1e-6)

    # 2) Large-vocab fallback: pipelined async HBM row gather.
    out_hbm = jax.block_until_ready(
        bert_embedding_forward(sequence, token_table, pos_table,
                               force_hbm_gather=True))
    assert jnp.allclose(out_hbm, ref, atol=1e-6, rtol=1e-6)

    # 3) Multi-chunk grid with sequence padding / slicing (resident path).
    S2 = 200
    seq2 = jax.random.randint(jax.random.PRNGKey(1), (B, S2), 0, vocab_size,
                              dtype=jnp.int32)
    ref2 = token_table[seq2] + pos_table[:S2][None, :, :]
    out2 = jax.block_until_ready(
        bert_embedding_forward(seq2, token_table, pos_table, tq=64))
    assert out2.shape == (B, S2, embed_size)
    assert jnp.allclose(out2, ref2, atol=1e-6, rtol=1e-6)

    print("KERNEL_OK")
</pallas_src>

<mosaic_0001>
module attributes {stable_mosaic.version = 11 : i64} {
  func.func @kernel(%arg0: i32, %arg1: i32, %arg2: memref<16xi32, #tpu.memory_space<smem>>, %arg3: memref<64x32xf32, #tpu.memory_space<vmem>>, %arg4: memref<8x32xf32, #tpu.memory_space<vmem>>, %arg5: memref<1x8x32xf32, #tpu.memory_space<vmem>>) attributes {dimension_semantics = [#tpu.dimension_semantics<parallel>, #tpu.dimension_semantics<parallel>], iteration_bounds = array<i64: 1, 2>, scalar_prefetch = 1 : i64, scratch_operands = 0 : i64, tpu.core_type = #tpu.core_type<tc>, window_params = [{pipeline_mode = #tpu.pipeline_mode<synchronous>, transform_indices = @transform_0, window_bounds = array<i64: 64, 32>}, {pipeline_mode = #tpu.pipeline_mode<synchronous>, transform_indices = @transform_1, window_bounds = array<i64: 8, 32>}, {transform_indices = @transform_2, window_bounds = array<i64: 1, 8, 32>}]} {
    %c8_i32 = arith.constant 8 : i32
    %0 = arith.muli %arg1, %c8_i32 : i32
    %c8_i32_0 = arith.constant 8 : i32
    %1 = arith.muli %arg0, %c8_i32_0 : i32
    %2 = arith.addi %0, %1 : i32
    %3 = tpu.assume_multiple %2, 8 : i32
    %c8_i32_1 = arith.constant 8 : i32
    %4 = arith.muli %arg0, %c8_i32_1 : i32
    %5 = tpu.assume_multiple %4, 8 : i32
    %c0_i32 = arith.constant 0 : i32
    %6 = arith.addi %3, %c0_i32 : i32
    %7 = arith.index_cast %6 : i32 to index
    %8 = memref.load %arg2[%7] : memref<16xi32, #tpu.memory_space<smem>>
    %9 = arith.index_cast %8 : i32 to index
    %c0 = arith.constant 0 : index
    %10 = vector.load %arg3[%9, %c0] : memref<64x32xf32, #tpu.memory_space<vmem>>, vector<1x32xf32>
    %11 = vector.shape_cast %10 : vector<1x32xf32> to vector<32xf32>
    %c0_2 = arith.constant 0 : index
    %12 = arith.index_cast %c0_i32 : i32 to index
    %c0_3 = arith.constant 0 : index
    %13 = vector.load %arg5[%c0_2, %12, %c0_3] : memref<1x8x32xf32, #tpu.memory_space<vmem>>, vector<1x1x32xf32>
    %14 = vector.shape_cast %13 : vector<1x1x32xf32> to vector<32xf32>
    %15 = vector.shape_cast %11 : vector<32xf32> to vector<1x1x32xf32>
    tpu.vector_store %arg5[%c0_2, %12, %c0_3], %15 {strides = array<i32>} : memref<1x8x32xf32, #tpu.memory_space<vmem>>, vector<1x1x32xf32>,
    %c1_i32 = arith.constant 1 : i32
    %16 = arith.addi %3, %c1_i32 : i32
    %17 = arith.index_cast %16 : i32 to index
    %18 = memref.load %arg2[%17] : memref<16xi32, #tpu.memory_space<smem>>
    %19 = arith.index_cast %18 : i32 to index
    %c0_4 = arith.constant 0 : index
    %20 = vector.load %arg3[%19, %c0_4] : memref<64x32xf32, #tpu.memory_space<vmem>>, vector<1x32xf32>
    %21 = vector.shape_cast %20 : vector<1x32xf32> to vector<32xf32>
    %c0_5 = arith.constant 0 : index
    %22 = arith.index_cast %c1_i32 : i32 to index
    %c0_6 = arith.constant 0 : index
    %23 = vector.load %arg5[%c0_5, %22, %c0_6] : memref<1x8x32xf32, #tpu.memory_space<vmem>>, vector<1x1x32xf32>
    %24 = vector.shape_cast %23 : vector<1x1x32xf32> to vector<32xf32>
    %25 = vector.shape_cast %21 : vector<32xf32> to vector<1x1x32xf32>
    tpu.vector_store %arg5[%c0_5, %22, %c0_6], %25 {strides = array<i32>} : memref<1x8x32xf32, #tpu.memory_space<vmem>>, vector<1x1x32xf32>,
    %c2_i32 = arith.constant 2 : i32
    %26 = arith.addi %3, %c2_i32 : i32
    %27 = arith.index_cast %26 : i32 to index
    %28 = memref.load %arg2[%27] : memref<16xi32, #tpu.memory_space<smem>>
    %29 = arith.index_cast %28 : i32 to index
    %c0_7 = arith.constant 0 : index
    %30 = vector.load %arg3[%29, %c0_7] : memref<64x32xf32, #tpu.memory_space<vmem>>, vector<1x32xf32>
    %31 = vector.shape_cast %30 : vector<1x32xf32> to vector<32xf32>
    %c0_8 = arith.constant 0 : index
    %32 = arith.index_cast %c2_i32 : i32 to index
    %c0_9 = arith.constant 0 : index
    %33 = vector.load %arg5[%c0_8, %32, %c0_9] : memref<1x8x32xf32, #tpu.memory_space<vmem>>, vector<1x1x32xf32>
    %34 = vector.shape_cast %33 : vector<1x1x32xf32> to vector<32xf32>
    %35 = vector.shape_cast %31 : vector<32xf32> to vector<1x1x32xf32>
    tpu.vector_store %arg5[%c0_8, %32, %c0_9], %35 {strides = array<i32>} : memref<1x8x32xf32, #tpu.memory_space<vmem>>, vector<1x1x32xf32>,
    %c3_i32 = arith.constant 3 : i32
    %36 = arith.addi %3, %c3_i32 : i32
    %37 = arith.index_cast %36 : i32 to index
    %38 = memref.load %arg2[%37] : memref<16xi32, #tpu.memory_space<smem>>
    %39 = arith.index_cast %38 : i32 to index
    %c0_10 = arith.constant 0 : index
    %40 = vector.load %arg3[%39, %c0_10] : memref<64x32xf32, #tpu.memory_space<vmem>>, vector<1x32xf32>
    %41 = vector.shape_cast %40 : vector<1x32xf32> to vector<32xf32>
    %c0_11 = arith.constant 0 : index
    %42 = arith.index_cast %c3_i32 : i32 to index
    %c0_12 = arith.constant 0 : index
    %43 = vector.load %arg5[%c0_11, %42, %c0_12] : memref<1x8x32xf32, #tpu.memory_space<vmem>>, vector<1x1x32xf32>
    %44 = vector.shape_cast %43 : vector<1x1x32xf32> to vector<32xf32>
    %45 = vector.shape_cast %41 : vector<32xf32> to vector<1x1x32xf32>
    tpu.vector_store %arg5[%c0_11, %42, %c0_12], %45 {strides = array<i32>} : memref<1x8x32xf32, #tpu.memory_space<vmem>>, vector<1x1x32xf32>,
    %c4_i32 = arith.constant 4 : i32
    %46 = arith.addi %3, %c4_i32 : i32
    %47 = arith.index_cast %46 : i32 to index
    %48 = memref.load %arg2[%47] : memref<16xi32, #tpu.memory_space<smem>>
    %49 = arith.index_cast %48 : i32 to index
    %c0_13 = arith.constant 0 : index
    %50 = vector.load %arg3[%49, %c0_13] : memref<64x32xf32, #tpu.memory_space<vmem>>, vector<1x32xf32>
    %51 = vector.shape_cast %50 : vector<1x32xf32> to vector<32xf32>
    %c0_14 = arith.constant 0 : index
    %52 = arith.index_cast %c4_i32 : i32 to index
    %c0_15 = arith.constant 0 : index
    %53 = vector.load %arg5[%c0_14, %52, %c0_15] : memref<1x8x32xf32, #tpu.memory_space<vmem>>, vector<1x1x32xf32>
    %54 = vector.shape_cast %53 : vector<1x1x32xf32> to vector<32xf32>
    %55 = vector.shape_cast %51 : vector<32xf32> to vector<1x1x32xf32>
    tpu.vector_store %arg5[%c0_14, %52, %c0_15], %55 {strides = array<i32>} : memref<1x8x32xf32, #tpu.memory_space<vmem>>, vector<1x1x32xf32>,
    %c5_i32 = arith.constant 5 : i32
    %56 = arith.addi %3, %c5_i32 : i32
    %57 = arith.index_cast %56 : i32 to index
    %58 = memref.load %arg2[%57] : memref<16xi32, #tpu.memory_space<smem>>
    %59 = arith.index_cast %58 : i32 to index
    %c0_16 = arith.constant 0 : index
    %60 = vector.load %arg3[%59, %c0_16] : memref<64x32xf32, #tpu.memory_space<vmem>>, vector<1x32xf32>
    %61 = vector.shape_cast %60 : vector<1x32xf32> to vector<32xf32>
    %c0_17 = arith.constant 0 : index
    %62 = arith.index_cast %c5_i32 : i32 to index
    %c0_18 = arith.constant 0 : index
    %63 = vector.load %arg5[%c0_17, %62, %c0_18] : memref<1x8x32xf32, #tpu.memory_space<vmem>>, vector<1x1x32xf32>
    %64 = vector.shape_cast %63 : vector<1x1x32xf32> to vector<32xf32>
    %65 = vector.shape_cast %61 : vector<32xf32> to vector<1x1x32xf32>
    tpu.vector_store %arg5[%c0_17, %62, %c0_18], %65 {strides = array<i32>} : memref<1x8x32xf32, #tpu.memory_space<vmem>>, vector<1x1x32xf32>,
    %c6_i32 = arith.constant 6 : i32
    %66 = arith.addi %3, %c6_i32 : i32
    %67 = arith.index_cast %66 : i32 to index
    %68 = memref.load %arg2[%67] : memref<16xi32, #tpu.memory_space<smem>>
    %69 = arith.index_cast %68 : i32 to index
    %c0_19 = arith.constant 0 : index
    %70 = vector.load %arg3[%69, %c0_19] : memref<64x32xf32, #tpu.memory_space<vmem>>, vector<1x32xf32>
    %71 = vector.shape_cast %70 : vector<1x32xf32> to vector<32xf32>
    %c0_20 = arith.constant 0 : index
    %72 = arith.index_cast %c6_i32 : i32 to index
    %c0_21 = arith.constant 0 : index
    %73 = vector.load %arg5[%c0_20, %72, %c0_21] : memref<1x8x32xf32, #tpu.memory_space<vmem>>, vector<1x1x32xf32>
    %74 = vector.shape_cast %73 : vector<1x1x32xf32> to vector<32xf32>
    %75 = vector.shape_cast %71 : vector<32xf32> to vector<1x1x32xf32>
    tpu.vector_store %arg5[%c0_20, %72, %c0_21], %75 {strides = array<i32>} : memref<1x8x32xf32, #tpu.memory_space<vmem>>, vector<1x1x32xf32>,
    %c7_i32 = arith.constant 7 : i32
    %76 = arith.addi %3, %c7_i32 : i32
    %77 = arith.index_cast %76 : i32 to index
    %78 = memref.load %arg2[%77] : memref<16xi32, #tpu.memory_space<smem>>
    %79 = arith.index_cast %78 : i32 to index
    %c0_22 = arith.constant 0 : index
    %80 = vector.load %arg3[%79, %c0_22] : memref<64x32xf32, #tpu.memory_space<vmem>>, vector<1x32xf32>
    %81 = vector.shape_cast %80 : vector<1x32xf32> to vector<32xf32>
    %c0_23 = arith.constant 0 : index
    %82 = arith.index_cast %c7_i32 : i32 to index
    %c0_24 = arith.constant 0 : index
    %83 = vector.load %arg5[%c0_23, %82, %c0_24] : memref<1x8x32xf32, #tpu.memory_space<vmem>>, vector<1x1x32xf32>
    %84 = vector.shape_cast %83 : vector<1x1x32xf32> to vector<32xf32>
    %85 = vector.shape_cast %81 : vector<32xf32> to vector<1x1x32xf32>
    tpu.vector_store %arg5[%c0_23, %82, %c0_24], %85 {strides = array<i32>} : memref<1x8x32xf32, #tpu.memory_space<vmem>>, vector<1x1x32xf32>,
    %c8_i32_25 = arith.constant 8 : i32
    %c0_26 = arith.constant 0 : index
    %c0_27 = arith.constant 0 : index
    %c0_28 = arith.constant 0 : index
    %86 = vector.load %arg5[%c0_26, %c0_27, %c0_28] : memref<1x8x32xf32, #tpu.memory_space<vmem>>, vector<1x8x32xf32>
    %87 = vector.shape_cast %86 : vector<1x8x32xf32> to vector<8x32xf32>
    %88 = arith.index_cast %5 : i32 to index
    %c0_29 = arith.constant 0 : index
    %89 = vector.load %arg4[%88, %c0_29] : memref<8x32xf32, #tpu.memory_space<vmem>>, vector<8x32xf32>
    %90 = arith.addf %87, %89 : vector<8x32xf32>
    %c0_30 = arith.constant 0 : index
    %c0_31 = arith.constant 0 : index
    %c0_32 = arith.constant 0 : index
    %91 = vector.load %arg5[%c0_30, %c0_31, %c0_32] : memref<1x8x32xf32, #tpu.memory_space<vmem>>, vector<1x8x32xf32>
    %92 = vector.shape_cast %91 : vector<1x8x32xf32> to vector<8x32xf32>
    %93 = vector.shape_cast %90 : vector<8x32xf32> to vector<1x8x32xf32>
    tpu.vector_store %arg5[%c0_30, %c0_31, %c0_32], %93 {strides = array<i32>} : memref<1x8x32xf32, #tpu.memory_space<vmem>>, vector<1x8x32xf32>,
    return
  }
  func.func @transform_0(%arg0: i32, %arg1: i32, %arg2: memref<16xi32, #tpu.memory_space<smem>>) -> (i32, i32) {
    %c0_i32 = arith.constant 0 : i32
    %c0_i32_0 = arith.constant 0 : i32
    %c0_i32_1 = arith.constant 0 : i32
    return %c0_i32, %c0_i32_0 : i32, i32
  }
  func.func @transform_1(%arg0: i32, %arg1: i32, %arg2: memref<16xi32, #tpu.memory_space<smem>>) -> (i32, i32) {
    %c0_i32 = arith.constant 0 : i32
    %c0_i32_0 = arith.constant 0 : i32
    %c0_i32_1 = arith.constant 0 : i32
    return %c0_i32, %c0_i32_0 : i32, i32
  }
  func.func @transform_2(%arg0: i32, %arg1: i32, %arg2: memref<16xi32, #tpu.memory_space<smem>>) -> (i32, i32, i32) {
    %c0_i32 = arith.constant 0 : i32
    %c0_i32_0 = arith.constant 0 : i32
    return %arg1, %arg0, %c0_i32 : i32, i32, i32
  }
}

module attributes {stable_mosaic.version = 11 : i64} {
  func.func @kernel(%arg0: i32, %arg1: i32, %arg2: memref<16xi32, #tpu.memory_space<smem>>, %arg3: memref<64x32xf32, #tpu.memory_space<vmem>>, %arg4: memref<8x32xf32, #tpu.memory_space<vmem>>, %arg5: memref<1x8x32xf32, #tpu.memory_space<vmem>>) attributes {dimension_semantics = [#tpu.dimension_semantics<parallel>, #tpu.dimension_semantics<parallel>], iteration_bounds = array<i64: 1, 2>, scalar_prefetch = 1 : i64, scratch_operands = 0 : i64, tpu.core_type = #tpu.core_type<tc>, window_params = [{pipeline_mode = #tpu.pipeline_mode<synchronous>, transform_indices = @transform_0, window_bounds = array<i64: 64, 32>}, {pipeline_mode = #tpu.pipeline_mode<synchronous>, transform_indices = @transform_1, window_bounds = array<i64: 8, 32>}, {transform_indices = @transform_2, window_bounds = array<i64: 1, 8, 32>}]} {
    %c8_i32 = arith.constant 8 : i32
    %0 = arith.muli %arg1, %c8_i32 : i32
    %c8_i32_0 = arith.constant 8 : i32
    %1 = arith.muli %arg0, %c8_i32_0 : i32
    %2 = arith.addi %0, %1 : i32
    %3 = tpu.assume_multiple %2, 8 : i32
    %c8_i32_1 = arith.constant 8 : i32
    %4 = arith.muli %arg0, %c8_i32_1 : i32
    %5 = tpu.assume_multiple %4, 8 : i32
    %c0_i32 = arith.constant 0 : i32
    %6 = arith.addi %3, %c0_i32 : i32
    %7 = arith.index_cast %6 : i32 to index
    %8 = memref.load %arg2[%7] : memref<16xi32, #tpu.memory_space<smem>>
    %9 = arith.index_cast %8 : i32 to index
    %c0 = arith.constant 0 : index
    %10 = vector.load %arg3[%9, %c0] : memref<64x32xf32, #tpu.memory_space<vmem>>, vector<1x32xf32>
    %11 = vector.shape_cast %10 : vector<1x32xf32> to vector<32xf32>
    %c0_2 = arith.constant 0 : index
    %12 = arith.index_cast %c0_i32 : i32 to index
    %c0_3 = arith.constant 0 : index
    %13 = vector.load %arg5[%c0_2, %12, %c0_3] : memref<1x8x32xf32, #tpu.memory_space<vmem>>, vector<1x1x32xf32>
    %14 = vector.shape_cast %13 : vector<1x1x32xf32> to vector<32xf32>
    %15 = vector.shape_cast %11 : vector<32xf32> to vector<1x1x32xf32>
    tpu.vector_store %arg5[%c0_2, %12, %c0_3], %15 {strides = array<i32>} : memref<1x8x32xf32, #tpu.memory_space<vmem>>, vector<1x1x32xf32>,
    %c1_i32 = arith.constant 1 : i32
    %16 = arith.addi %3, %c1_i32 : i32
    %17 = arith.index_cast %16 : i32 to index
    %18 = memref.load %arg2[%17] : memref<16xi32, #tpu.memory_space<smem>>
    %19 = arith.index_cast %18 : i32 to index
    %c0_4 = arith.constant 0 : index
    %20 = vector.load %arg3[%19, %c0_4] : memref<64x32xf32, #tpu.memory_space<vmem>>, vector<1x32xf32>
    %21 = vector.shape_cast %20 : vector<1x32xf32> to vector<32xf32>
    %c0_5 = arith.constant 0 : index
    %22 = arith.index_cast %c1_i32 : i32 to index
    %c0_6 = arith.constant 0 : index
    %23 = vector.load %arg5[%c0_5, %22, %c0_6] : memref<1x8x32xf32, #tpu.memory_space<vmem>>, vector<1x1x32xf32>
    %24 = vector.shape_cast %23 : vector<1x1x32xf32> to vector<32xf32>
    %25 = vector.shape_cast %21 : vector<32xf32> to vector<1x1x32xf32>
    tpu.vector_store %arg5[%c0_5, %22, %c0_6], %25 {strides = array<i32>} : memref<1x8x32xf32, #tpu.memory_space<vmem>>, vector<1x1x32xf32>,
    %c2_i32 = arith.constant 2 : i32
    %26 = arith.addi %3, %c2_i32 : i32
    %27 = arith.index_cast %26 : i32 to index
    %28 = memref.load %arg2[%27] : memref<16xi32, #tpu.memory_space<smem>>
    %29 = arith.index_cast %28 : i32 to index
    %c0_7 = arith.constant 0 : index
    %30 = vector.load %arg3[%29, %c0_7] : memref<64x32xf32, #tpu.memory_space<vmem>>, vector<1x32xf32>
    %31 = vector.shape_cast %30 : vector<1x32xf32> to vector<32xf32>
    %c0_8 = arith.constant 0 : index
    %32 = arith.index_cast %c2_i32 : i32 to index
    %c0_9 = arith.constant 0 : index
    %33 = vector.load %arg5[%c0_8, %32, %c0_9] : memref<1x8x32xf32, #tpu.memory_space<vmem>>, vector<1x1x32xf32>
    %34 = vector.shape_cast %33 : vector<1x1x32xf32> to vector<32xf32>
    %35 = vector.shape_cast %31 : vector<32xf32> to vector<1x1x32xf32>
    tpu.vector_store %arg5[%c0_8, %32, %c0_9], %35 {strides = array<i32>} : memref<1x8x32xf32, #tpu.memory_space<vmem>>, vector<1x1x32xf32>,
    %c3_i32 = arith.constant 3 : i32
    %36 = arith.addi %3, %c3_i32 : i32
    %37 = arith.index_cast %36 : i32 to index
    %38 = memref.load %arg2[%37] : memref<16xi32, #tpu.memory_space<smem>>
    %39 = arith.index_cast %38 : i32 to index
    %c0_10 = arith.constant 0 : index
    %40 = vector.load %arg3[%39, %c0_10] : memref<64x32xf32, #tpu.memory_space<vmem>>, vector<1x32xf32>
    %41 = vector.shape_cast %40 : vector<1x32xf32> to vector<32xf32>
    %c0_11 = arith.constant 0 : index
    %42 = arith.index_cast %c3_i32 : i32 to index
    %c0_12 = arith.constant 0 : index
    %43 = vector.load %arg5[%c0_11, %42, %c0_12] : memref<1x8x32xf32, #tpu.memory_space<vmem>>, vector<1x1x32xf32>
    %44 = vector.shape_cast %43 : vector<1x1x32xf32> to vector<32xf32>
    %45 = vector.shape_cast %41 : vector<32xf32> to vector<1x1x32xf32>
    tpu.vector_store %arg5[%c0_11, %42, %c0_12], %45 {strides = array<i32>} : memref<1x8x32xf32, #tpu.memory_space<vmem>>, vector<1x1x32xf32>,
    %c4_i32 = arith.constant 4 : i32
    %46 = arith.addi %3, %c4_i32 : i32
    %47 = arith.index_cast %46 : i32 to index
    %48 = memref.load %arg2[%47] : memref<16xi32, #tpu.memory_space<smem>>
    %49 = arith.index_cast %48 : i32 to index
    %c0_13 = arith.constant 0 : index
    %50 = vector.load %arg3[%49, %c0_13] : memref<64x32xf32, #tpu.memory_space<vmem>>, vector<1x32xf32>
    %51 = vector.shape_cast %50 : vector<1x32xf32> to vector<32xf32>
    %c0_14 = arith.constant 0 : index
    %52 = arith.index_cast %c4_i32 : i32 to index
    %c0_15 = arith.constant 0 : index
    %53 = vector.load %arg5[%c0_14, %52, %c0_15] : memref<1x8x32xf32, #tpu.memory_space<vmem>>, vector<1x1x32xf32>
    %54 = vector.shape_cast %53 : vector<1x1x32xf32> to vector<32xf32>
    %55 = vector.shape_cast %51 : vector<32xf32> to vector<1x1x32xf32>
    tpu.vector_store %arg5[%c0_14, %52, %c0_15], %55 {strides = array<i32>} : memref<1x8x32xf32, #tpu.memory_space<vmem>>, vector<1x1x32xf32>,
    %c5_i32 = arith.constant 5 : i32
    %56 = arith.addi %3, %c5_i32 : i32
    %57 = arith.index_cast %56 : i32 to index
    %58 = memref.load %arg2[%57] : memref<16xi32, #tpu.memory_space<smem>>
    %59 = arith.index_cast %58 : i32 to index
    %c0_16 = arith.constant 0 : index
    %60 = vector.load %arg3[%59, %c0_16] : memref<64x32xf32, #tpu.memory_space<vmem>>, vector<1x32xf32>
    %61 = vector.shape_cast %60 : vector<1x32xf32> to vector<32xf32>
    %c0_17 = arith.constant 0 : index
    %62 = arith.index_cast %c5_i32 : i32 to index
    %c0_18 = arith.constant 0 : index
    %63 = vector.load %arg5[%c0_17, %62, %c0_18] : memref<1x8x32xf32, #tpu.memory_space<vmem>>, vector<1x1x32xf32>
    %64 = vector.shape_cast %63 : vector<1x1x32xf32> to vector<32xf32>
    %65 = vector.shape_cast %61 : vector<32xf32> to vector<1x1x32xf32>
    tpu.vector_store %arg5[%c0_17, %62, %c0_18], %65 {strides = array<i32>} : memref<1x8x32xf32, #tpu.memory_space<vmem>>, vector<1x1x32xf32>,
    %c6_i32 = arith.constant 6 : i32
    %66 = arith.addi %3, %c6_i32 : i32
    %67 = arith.index_cast %66 : i32 to index
    %68 = memref.load %arg2[%67] : memref<16xi32, #tpu.memory_space<smem>>
    %69 = arith.index_cast %68 : i32 to index
    %c0_19 = arith.constant 0 : index
    %70 = vector.load %arg3[%69, %c0_19] : memref<64x32xf32, #tpu.memory_space<vmem>>, vector<1x32xf32>
    %71 = vector.shape_cast %70 : vector<1x32xf32> to vector<32xf32>
    %c0_20 = arith.constant 0 : index
    %72 = arith.index_cast %c6_i32 : i32 to index
    %c0_21 = arith.constant 0 : index
    %73 = vector.load %arg5[%c0_20, %72, %c0_21] : memref<1x8x32xf32, #tpu.memory_space<vmem>>, vector<1x1x32xf32>
    %74 = vector.shape_cast %73 : vector<1x1x32xf32> to vector<32xf32>
    %75 = vector.shape_cast %71 : vector<32xf32> to vector<1x1x32xf32>
    tpu.vector_store %arg5[%c0_20, %72, %c0_21], %75 {strides = array<i32>} : memref<1x8x32xf32, #tpu.memory_space<vmem>>, vector<1x1x32xf32>,
    %c7_i32 = arith.constant 7 : i32
    %76 = arith.addi %3, %c7_i32 : i32
    %77 = arith.index_cast %76 : i32 to index
    %78 = memref.load %arg2[%77] : memref<16xi32, #tpu.memory_space<smem>>
    %79 = arith.index_cast %78 : i32 to index
    %c0_22 = arith.constant 0 : index
    %80 = vector.load %arg3[%79, %c0_22] : memref<64x32xf32, #tpu.memory_space<vmem>>, vector<1x32xf32>
    %81 = vector.shape_cast %80 : vector<1x32xf32> to vector<32xf32>
    %c0_23 = arith.constant 0 : index
    %82 = arith.index_cast %c7_i32 : i32 to index
    %c0_24 = arith.constant 0 : index
    %83 = vector.load %arg5[%c0_23, %82, %c0_24] : memref<1x8x32xf32, #tpu.memory_space<vmem>>, vector<1x1x32xf32>
    %84 = vector.shape_cast %83 : vector<1x1x32xf32> to vector<32xf32>
    %85 = vector.shape_cast %81 : vector<32xf32> to vector<1x1x32xf32>
    tpu.vector_store %arg5[%c0_23, %82, %c0_24], %85 {strides = array<i32>} : memref<1x8x32xf32, #tpu.memory_space<vmem>>, vector<1x1x32xf32>,
    %c8_i32_25 = arith.constant 8 : i32
    %c0_26 = arith.constant 0 : index
    %c0_27 = arith.constant 0 : index
    %c0_28 = arith.constant 0 : index
    %86 = vector.load %arg5[%c0_26, %c0_27, %c0_28] : memref<1x8x32xf32, #tpu.memory_space<vmem>>, vector<1x8x32xf32>
    %87 = vector.shape_cast %86 : vector<1x8x32xf32> to vector<8x32xf32>
    %88 = arith.index_cast %5 : i32 to index
    %c0_29 = arith.constant 0 : index
    %89 = vector.load %arg4[%88, %c0_29] : memref<8x32xf32, #tpu.memory_space<vmem>>, vector<8x32xf32>
    %90 = arith.addf %87, %89 : vector<8x32xf32>
    %c0_30 = arith.constant 0 : index
    %c0_31 = arith.constant 0 : index
    %c0_32 = arith.constant 0 : index
    %91 = vector.load %arg5[%c0_30, %c0_31, %c0_32] : memref<1x8x32xf32, #tpu.memory_space<vmem>>, vector<1x8x32xf32>
    %92 = vector.shape_cast %91 : vector<1x8x32xf32> to vector<8x32xf32>
    %93 = vector.shape_cast %90 : vector<8x32xf32> to vector<1x8x32xf32>
    tpu.vector_store %arg5[%c0_30, %c0_31, %c0_32], %93 {strides = array<i32>} : memref<1x8x32xf32, #tpu.memory_space<vmem>>, vector<1x8x32xf32>,
    return
  }
  func.func @transform_0(%arg0: i32, %arg1: i32, %arg2: memref<16xi32, #tpu.memory_space<smem>>) -> (i32, i32) {
    %c0_i32 = arith.constant 0 : i32
    %c0_i32_0 = arith.constant 0 : i32
    %c0_i32_1 = arith.constant 0 : i32
    return %c0_i32, %c0_i32_0 : i32, i32
  }
  func.func @transform_1(%arg0: i32, %arg1: i32, %arg2: memref<16xi32, #tpu.memory_space<smem>>) -> (i32, i32) {
    %c0_i32 = arith.constant 0 : i32
    %c0_i32_0 = arith.constant 0 : i32
    %c0_i32_1 = arith.constant 0 : i32
    return %c0_i32, %c0_i32_0 : i32, i32
  }
  func.func @transform_2(%arg0: i32, %arg1: i32, %arg2: memref<16xi32, #tpu.memory_space<smem>>) -> (i32, i32, i32) {
    %c0_i32 = arith.constant 0 : i32
    %c0_i32_0 = arith.constant 0 : i32
    return %arg1, %arg0, %c0_i32 : i32, i32, i32
  }
}

</mosaic_0001>

<llo_original>
// kernel: tpu_custom_call.1
$region0: #{tpu_custom_call.1}
  #allocation0 [shape = 'u32[]', space=smem, size = 0x4, offset = 0x4, fixed_abs, tag = 'smem constant byte address 0x4 - core index']
  #allocation1 [shape = 'u32[144,128]{1,0:T(1,128)}', space=vmem, size = 0x12000, scoped, tag = 'internal scratch']
  #allocation2 [shape = 's32[1]{0}', space=sflag, size = 0x4, scoped, tag = 'scoped memory for tpu_custom_call.1']
  #allocation3 [shape = 'u8[512]{0}', space=smem, size = 0x200, scoped, tag = 'prefetched SMEM operand 0']
  %s0 = inlined_call_operand.vmem [shape: s32[16], index: 0, kind: input, shape index: {}]
  %s1 = inlined_call_operand.vmem [shape: f32[64,32], index: 1, kind: input, shape index: {}]
  %s2 = inlined_call_operand.vmem [shape: f32[8,32], index: 2, kind: input, shape index: {}]
  %s3 = inlined_call_operand.hbm [shape: f32[2,8,32], index: 3, kind: output, shape index: {}]
  %s4 = sld [smem:[#allocation0]]
  $region41: #{tpu_custom_call.1} parent=0
    _
  %s6 = ssub.s32 1, %s4
  %s7 = scalar_select 0, %s6, %s4
  %s8 = sshll.u32 %s0, 4
  %s9 = int_to_ptr.vmem [resolvable:$true] %s8
  %11 = dma.vmem_to_smem %s9, 16, [#allocation3], [#allocation2]
  %12 = dma.done [#allocation2], 16
  %13 = sfence
  $region1: #{tpu_custom_call.1} parent=0
    #allocation4 [shape = 'u8[8192]{0}', space=vmem, size = 0x2000, scoped, tag = 'output window, operand 0']
    #allocation5 [shape = 's32[2]{0}', space=sflag, size = 0x8, scoped, tag = 'scoped memory for tpu_custom_call.1']
    %14 = vsyncpa [#allocation5], 0
    %s15 = scalar_lea.sflag [#allocation5], 1
    %16 = vsyncpa %s15, 0
    loop: start=0, step=1, limit=4
    $region2: #{tpu_custom_call.1} parent=1 // loop_pre_header
      _
    $region3: #{tpu_custom_call.1} parent=1 // loop_header
      %s18 = sphi 0, %s22
      %p19 = scmp.ge.s32.totalorder %s18, 4
      %s25 = sphi 0, %s37
      %s26 = sphi 0, %s33
      %s27 = sphi 0, %s25
      %s28 = sphi 0, %s26
      %s29 = sphi 0, %s27
      %s30 = sphi 0, %s28
      %s38 = sphi 0, %s38
      %s40 = sphi 0, %s38
      %s41 = sphi 0, %s40
      %s55 = sphi 0, %s41
      %s59 = sphi 0, %s59
      %s61 = sphi 0, %s59
      %s62 = sphi 0, %s61
      %s76 = sphi 0, %s62
      %s84 = sphi 0, %s86
      %s87 = sphi 0, %s84
      %s88 = sphi 0, %s87
      %s104 = sphi 0, %s88
    $region4: #{tpu_custom_call.1} parent=1 // loop_header_branch
      %21 = sbr.rel (%p19) target = $region8
    $region5: #{tpu_custom_call.1} parent=1 // loop_body
      %s23 = ssub.s32 %s18, 1
      %s24 = ssub.s32 %s18, 2
      %s31 = sadd.s32 1, %s26
      %p32 = scmp.ge.s32.totalorder %s31, 2
      %s33 = scalar_select %p32, 0, %s31
      %s34 = sadd.s32 1, %s25
      %s35 = scalar_select %p32, %s34, %s25
      %p36 = scmp.ge.s32.totalorder %s35, 1
      %s37 = scalar_select %p36, 0, %s35
      %s39 = sadd.s32 %s38, 1
      %p42 = scmp.eq.s32.totalorder %s18, 1
      %p43 = scmp.ne.s32.totalorder %s38, %s40
      %p44 = scmp.eq.s32.totalorder %s18, 0
      %p45 = por %p43, %p44
      %p46 = scmp.ne.s32.totalorder %s38, %s40
      %p47 = scmp.eq.s32.totalorder %s23, 1
      %p48 = por %p46, %p47
      %p49 = scmp.ne.s32.totalorder %s40, %s41
      %p50 = scmp.eq.s32.totalorder %s23, 0
      %p51 = por %p49, %p50
      %p52 = scmp.ne.s32.totalorder %s40, %s41
      %p53 = scmp.eq.s32.totalorder %s24, 1
      %p54 = por %p52, %p53
      %p56 = scmp.ne.s32.totalorder %s41, %s55
      %p57 = scmp.eq.s32.totalorder %s24, 0
      %p58 = por %p56, %p57
      %s60 = sadd.s32 %s59, 1
      %p63 = scmp.eq.s32.totalorder %s18, 1
      %p64 = scmp.ne.s32.totalorder %s59, %s61
      %p65 = scmp.eq.s32.totalorder %s18, 0
      %p66 = por %p64, %p65
      %p67 = scmp.ne.s32.totalorder %s59, %s61
      %p68 = scmp.eq.s32.totalorder %s23, 1
      %p69 = por %p67, %p68
      %p70 = scmp.ne.s32.totalorder %s61, %s62
      %p71 = scmp.eq.s32.totalorder %s23, 0
      %p72 = por %p70, %p71
      %p73 = scmp.ne.s32.totalorder %s61, %s62
      %p74 = scmp.eq.s32.totalorder %s24, 1
      %p75 = por %p73, %p74
      %p77 = scmp.ne.s32.totalorder %s62, %s76
      %p78 = scmp.eq.s32.totalorder %s24, 0
      %p79 = por %p77, %p78
      %s80 = ssub.s32 %s26, %s33
      %s81 = ssub.s32 %s25, %s37
      %s82 = sor.u32 %s80, %s81
      %p83 = scmp.eq.s32.totalorder %s82, 0
      %s85 = sadd.s32 %s84, 1
      %s86 = scalar_select %p83, %s84, %s85
      %p89 = pneg %p83
      %p90 = scmp.eq.s32.totalorder %s18, 1
      %p91 = por %p89, %p90
      %p92 = scmp.ne.s32.totalorder %s84, %s87
      %p93 = scmp.eq.s32.totalorder %s18, 0
      %p94 = por %p92, %p93
      %p95 = scmp.ne.s32.totalorder %s84, %s87
      %p96 = scmp.eq.s32.totalorder %s23, 1
      %p97 = por %p95, %p96
      %p98 = scmp.ne.s32.totalorder %s87, %s88
      %p99 = scmp.eq.s32.totalorder %s23, 0
      %p100 = por %p98, %p99
      %p101 = scmp.ne.s32.totalorder %s87, %s88
      %p102 = scmp.eq.s32.totalorder %s24, 1
      %p103 = por %p101, %p102
      %p105 = scmp.ne.s32.totalorder %s88, %s104
      %p106 = scmp.eq.s32.totalorder %s24, 0
      %p107 = por %p105, %p106
      %p108 = scmp.le.s32.totalorder 1, %s18
      %p109 = scmp.lt.s32.totalorder %s18, 3
      %p110 = pnand %p108, %p109
      %p111 = pneg %p110
      // Predicated region
      $region9: #{tpu_custom_call.1} parent=5 // pred_check
        _
      $region10: #{tpu_custom_call.1} parent=5 // pred_check_branch
        %113 = sbr.rel (%p110) target = $region12
      $region11: #{tpu_custom_call.1} parent=5 // pred_region
        %s114 = ssub.s32 %s18, 1
        // Predicated region
        $region13: #{tpu_custom_call.1} parent=11 // pred_check
          %p115 = pneg %p51
        $region14: #{tpu_custom_call.1} parent=11 // pred_check_branch
          %117 = sbr.rel (%p115) target = $region16
        $region15: #{tpu_custom_call.1} parent=11 // pred_region
          _
        $region16: #{tpu_custom_call.1} parent=11 // pred_fallthru
          _
        // Predicated region
        $region17: #{tpu_custom_call.1} parent=11 // pred_check
          %p118 = pneg %p72
        $region18: #{tpu_custom_call.1} parent=11 // pred_check_branch
          %120 = sbr.rel (%p118) target = $region20
        $region19: #{tpu_custom_call.1} parent=11 // pred_region
          _
        $region20: #{tpu_custom_call.1} parent=11 // pred_fallthru
          _
      $region12: #{tpu_custom_call.1} parent=5 // pred_fallthru
        _
      %p121 = scmp.lt.s32.totalorder %s18, 2
      // Predicated region
      $region21: #{tpu_custom_call.1} parent=5 // pred_check
        %p122 = pneg %p121
      $region22: #{tpu_custom_call.1} parent=5 // pred_check_branch
        %124 = sbr.rel (%p122) target = $region24
      $region23: #{tpu_custom_call.1} parent=5 // pred_region
        _
      $region24: #{tpu_custom_call.1} parent=5 // pred_fallthru
        _
      %p125 = scmp.le.s32.totalorder 1, %s18
      %p126 = scmp.lt.s32.totalorder %s18, 3
      %p127 = pnand %p125, %p126
      %p128 = pneg %p127
      // Predicated region
      $region25: #{tpu_custom_call.1} parent=5 // pred_check
        _
      $region26: #{tpu_custom_call.1} parent=5 // pred_check_branch
        %130 = sbr.rel (%p127) target = $region28
      $region27: #{tpu_custom_call.1} parent=5 // pred_region
        %s131 = ssub.s32 %s18, 1
        %p132 = pneg %p51
        %p133 = pneg %p48
        %p134 = pneg %p72
        %p135 = pneg %p69
        %p136 = pneg %p100
        %p137 = pneg %p97
        %s138 = sand.u32 %s87, 1
        %s139 = scalar_lea.sflag [#allocation5], %s138
        %s140 = sand.u32 %s87, 1
        %s141 = smul.addr %s140, 8
        %s142 = scalar_lea.vmem [#allocation4], %s141
        %s143 = smul.u32 %s28, 8
        %s144 = smul.u32 %s27, 8
        %s145 = sadd.s32 %s143, %s144
        %s146 = sld [smem:[#allocation3 + %s145]]
        %s147 = scalar_lea.vmem %s1, %s146
        %v148 = vld [vmem:[%s147] sm:$0x1]
        %vm149 = vcmask 253952
        %150 = vst.msk [vmem:[%s142] sm:$0x1] %vm149, %v148
        %s151 = sadd.s32 %s145, 1
        %s152 = sld [smem:[#allocation3 + %s151]]
        %s153 = scalar_lea.vmem %s1, %s152
        %v154 = vld [vmem:[%s153] sm:$0x1]
        %155 = vst.msk [vmem:[%s142 + $0x1] sm:$0x1] %vm149, %v154
        %s156 = sadd.s32 %s145, 2
        %s157 = sld [smem:[#allocation3 + %s156]]
        %s158 = scalar_lea.vmem %s1, %s157
        %v159 = vld [vmem:[%s158] sm:$0x1]
        %160 = vst.msk [vmem:[%s142 + $0x2] sm:$0x1] %vm149, %v159
        %s161 = sadd.s32 %s145, 3
        %s162 = sld [smem:[#allocation3 + %s161]]
        %s163 = scalar_lea.vmem %s1, %s162
        %v164 = vld [vmem:[%s163] sm:$0x1]
        %165 = vst.msk [vmem:[%s142 + $0x3] sm:$0x1] %vm149, %v164
        %s166 = sadd.s32 %s145, 4
        %s167 = sld [smem:[#allocation3 + %s166]]
        %s168 = scalar_lea.vmem %s1, %s167
        %v169 = vld [vmem:[%s168] sm:$0x1]
        %170 = vst.msk [vmem:[%s142 + $0x4] sm:$0x1] %vm149, %v169
        %s171 = sadd.s32 %s145, 5
        %s172 = sld [smem:[#allocation3 + %s171]]
        %s173 = scalar_lea.vmem %s1, %s172
        %v174 = vld [vmem:[%s173] sm:$0x1]
        %175 = vst.msk [vmem:[%s142 + $0x5] sm:$0x1] %vm149, %v174
        %s176 = sadd.s32 %s145, 6
        %s177 = sld [smem:[#allocation3 + %s176]]
        %s178 = scalar_lea.vmem %s1, %s177
        %v179 = vld [vmem:[%s178] sm:$0x1]
        %180 = vst.msk [vmem:[%s142 + $0x6] sm:$0x1] %vm149, %v179
        %s181 = sadd.s32 %s145, 7
        %s182 = sld [smem:[#allocation3 + %s181]]
        %s183 = scalar_lea.vmem %s1, %s182
        %v184 = vld [vmem:[%s183] sm:$0x1]
        %185 = vst.msk [vmem:[%s142 + $0x7] sm:$0x1] %vm149, %v184
        %v186 = vld [vmem:[%s142] sm:$0xff]
        %s187 = scalar_lea.vmem %s2, %s144
        %v188 = vld [vmem:[%s187] sm:$0xff]
        %v189 = vadd.f32 %v186, %v188
        %vm190 = vcmask 261120
        %191 = vst.msk [vmem:[%s142] sm:$0xff] %vm190, %v189
        %s192 = sand.u32 %s87, 1
        %s193 = scalar_lea.sflag [#allocation5], %s192
        %s194 = sand.u32 %s87, 1
        %s195 = smul.addr %s194, 8
        %s196 = scalar_lea.vmem [#allocation4], %s195
        // Predicated region
        $region29: #{tpu_custom_call.1} parent=27 // pred_check
          %p197 = pneg %p97
        $region30: #{tpu_custom_call.1} parent=27 // pred_check_branch
          %199 = sbr.rel (%p197) target = $region32
        $region31: #{tpu_custom_call.1} parent=27 // pred_region
          %s201 = ssub.s32 128, 128
          %202 = vsyncadd %s193, %s201
          %s203 = sadd.s32 %s27, %s28
          %s204 = smul.addr %s203, 128
          %s205 = scalar_lea.hbm %s3, %s204
          %s207 = sshll.u32 %s196, 4
          %s208 = int_to_ptr.vmem [resolvable:$true] %s207
          %210 = dma.vmem_to_hbm [thread:$0]  %s208, 128, %s205, %s193
        $region32: #{tpu_custom_call.1} parent=27 // pred_fallthru
          _
      $region28: #{tpu_custom_call.1} parent=5 // pred_fallthru
        _
      %p211 = scmp.le.s32.totalorder 2, %s18
      // Predicated region
      $region33: #{tpu_custom_call.1} parent=5 // pred_check
        %p212 = pneg %p211
      $region34: #{tpu_custom_call.1} parent=5 // pred_check_branch
        %214 = sbr.rel (%p212) target = $region36
      $region35: #{tpu_custom_call.1} parent=5 // pred_region
        %s215 = ssub.s32 %s18, 2
        // Predicated region
        $region37: #{tpu_custom_call.1} parent=35 // pred_check
          %p216 = pneg %p103
        $region38: #{tpu_custom_call.1} parent=35 // pred_check_branch
          %218 = sbr.rel (%p216) target = $region40
        $region39: #{tpu_custom_call.1} parent=35 // pred_region
          %s219 = sand.u32 %s88, 1
          %s220 = scalar_lea.sflag [#allocation5], %s219
          %s221 = sand.u32 %s88, 1
          %s222 = smul.addr %s221, 8
          %s223 = scalar_lea.vmem [#allocation4], %s222
          %224 = dma.done %s220, 128
        $region40: #{tpu_custom_call.1} parent=35 // pred_fallthru
          _
      $region36: #{tpu_custom_call.1} parent=5 // pred_fallthru
        _
    $region6: #{tpu_custom_call.1} parent=1 // loop_footer
      %s22 = sadd.s32 1, %s18
    $region7: #{tpu_custom_call.1} parent=1 // loop_footer_branch
      %17 = sbr.rel target = $region3
    $region8: #{tpu_custom_call.1} parent=1 // loop_exit
      _
    %225 = vsyncpa [#allocation5], 1
    %s226 = scalar_lea.sflag [#allocation5], 1
    %227 = vsyncpa %s226, 1

// kernel: tpu_custom_call.1
$region0: #{tpu_custom_call.1}
  #allocation0 [shape = 'u32[]', space=smem, size = 0x4, offset = 0x4, fixed_abs, tag = 'smem constant byte address 0x4 - core index']
  #allocation1 [shape = 'u32[144,128]{1,0:T(1,128)}', space=vmem, size = 0x12000, scoped, tag = 'internal scratch']
  #allocation2 [shape = 's32[1]{0}', space=sflag, size = 0x4, scoped, tag = 'scoped memory for tpu_custom_call.1']
  #allocation3 [shape = 'u8[512]{0}', space=smem, size = 0x200, scoped, tag = 'prefetched SMEM operand 0']
  %s0 = inlined_call_operand.vmem [shape: s32[16], index: 0, kind: input, shape index: {}]
  %s1 = inlined_call_operand.vmem [shape: f32[64,32], index: 1, kind: input, shape index: {}]
  %s2 = inlined_call_operand.vmem [shape: f32[8,32], index: 2, kind: input, shape index: {}]
  %s3 = inlined_call_operand.hbm [shape: f32[2,8,32], index: 3, kind: output, shape index: {}]
  %s4 = sld [smem:[#allocation0]]
  $region41: #{tpu_custom_call.1} parent=0
    _
  %s6 = ssub.s32 1, %s4
  %s7 = scalar_select 0, %s6, %s4
  %s8 = sshll.u32 %s0, 4
  %s9 = int_to_ptr.vmem [resolvable:$true] %s8
  %11 = dma.vmem_to_smem %s9, 16, [#allocation3], [#allocation2]
  %12 = dma.done [#allocation2], 16
  %13 = sfence
  $region1: #{tpu_custom_call.1} parent=0
    #allocation4 [shape = 'u8[8192]{0}', space=vmem, size = 0x2000, scoped, tag = 'output window, operand 0']
    #allocation5 [shape = 's32[2]{0}', space=sflag, size = 0x8, scoped, tag = 'scoped memory for tpu_custom_call.1']
    %14 = vsyncpa [#allocation5], 0
    %s15 = scalar_lea.sflag [#allocation5], 1
    %16 = vsyncpa %s15, 0
    loop: start=0, step=1, limit=4
    $region2: #{tpu_custom_call.1} parent=1 // loop_pre_header
      _
    $region3: #{tpu_custom_call.1} parent=1 // loop_header
      %s18 = sphi 0, %s22
      %p19 = scmp.ge.s32.totalorder %s18, 4
      %s25 = sphi 0, %s37
      %s26 = sphi 0, %s33
      %s27 = sphi 0, %s25
      %s28 = sphi 0, %s26
      %s29 = sphi 0, %s27
      %s30 = sphi 0, %s28
      %s38 = sphi 0, %s38
      %s40 = sphi 0, %s38
      %s41 = sphi 0, %s40
      %s55 = sphi 0, %s41
      %s59 = sphi 0, %s59
      %s61 = sphi 0, %s59
      %s62 = sphi 0, %s61
      %s76 = sphi 0, %s62
      %s84 = sphi 0, %s86
      %s87 = sphi 0, %s84
      %s88 = sphi 0, %s87
      %s104 = sphi 0, %s88
    $region4: #{tpu_custom_call.1} parent=1 // loop_header_branch
      %21 = sbr.rel (%p19) target = $region8
    $region5: #{tpu_custom_call.1} parent=1 // loop_body
      %s23 = ssub.s32 %s18, 1
      %s24 = ssub.s32 %s18, 2
      %s31 = sadd.s32 1, %s26
      %p32 = scmp.ge.s32.totalorder %s31, 2
      %s33 = scalar_select %p32, 0, %s31
      %s34 = sadd.s32 1, %s25
      %s35 = scalar_select %p32, %s34, %s25
      %p36 = scmp.ge.s32.totalorder %s35, 1
      %s37 = scalar_select %p36, 0, %s35
      %s39 = sadd.s32 %s38, 1
      %p42 = scmp.eq.s32.totalorder %s18, 1
      %p43 = scmp.ne.s32.totalorder %s38, %s40
      %p44 = scmp.eq.s32.totalorder %s18, 0
      %p45 = por %p43, %p44
      %p46 = scmp.ne.s32.totalorder %s38, %s40
      %p47 = scmp.eq.s32.totalorder %s23, 1
      %p48 = por %p46, %p47
      %p49 = scmp.ne.s32.totalorder %s40, %s41
      %p50 = scmp.eq.s32.totalorder %s23, 0
      %p51 = por %p49, %p50
      %p52 = scmp.ne.s32.totalorder %s40, %s41
      %p53 = scmp.eq.s32.totalorder %s24, 1
      %p54 = por %p52, %p53
      %p56 = scmp.ne.s32.totalorder %s41, %s55
      %p57 = scmp.eq.s32.totalorder %s24, 0
      %p58 = por %p56, %p57
      %s60 = sadd.s32 %s59, 1
      %p63 = scmp.eq.s32.totalorder %s18, 1
      %p64 = scmp.ne.s32.totalorder %s59, %s61
      %p65 = scmp.eq.s32.totalorder %s18, 0
      %p66 = por %p64, %p65
      %p67 = scmp.ne.s32.totalorder %s59, %s61
      %p68 = scmp.eq.s32.totalorder %s23, 1
      %p69 = por %p67, %p68
      %p70 = scmp.ne.s32.totalorder %s61, %s62
      %p71 = scmp.eq.s32.totalorder %s23, 0
      %p72 = por %p70, %p71
      %p73 = scmp.ne.s32.totalorder %s61, %s62
      %p74 = scmp.eq.s32.totalorder %s24, 1
      %p75 = por %p73, %p74
      %p77 = scmp.ne.s32.totalorder %s62, %s76
      %p78 = scmp.eq.s32.totalorder %s24, 0
      %p79 = por %p77, %p78
      %s80 = ssub.s32 %s26, %s33
      %s81 = ssub.s32 %s25, %s37
      %s82 = sor.u32 %s80, %s81
      %p83 = scmp.eq.s32.totalorder %s82, 0
      %s85 = sadd.s32 %s84, 1
      %s86 = scalar_select %p83, %s84, %s85
      %p89 = pneg %p83
      %p90 = scmp.eq.s32.totalorder %s18, 1
      %p91 = por %p89, %p90
      %p92 = scmp.ne.s32.totalorder %s84, %s87
      %p93 = scmp.eq.s32.totalorder %s18, 0
      %p94 = por %p92, %p93
      %p95 = scmp.ne.s32.totalorder %s84, %s87
      %p96 = scmp.eq.s32.totalorder %s23, 1
      %p97 = por %p95, %p96
      %p98 = scmp.ne.s32.totalorder %s87, %s88
      %p99 = scmp.eq.s32.totalorder %s23, 0
      %p100 = por %p98, %p99
      %p101 = scmp.ne.s32.totalorder %s87, %s88
      %p102 = scmp.eq.s32.totalorder %s24, 1
      %p103 = por %p101, %p102
      %p105 = scmp.ne.s32.totalorder %s88, %s104
      %p106 = scmp.eq.s32.totalorder %s24, 0
      %p107 = por %p105, %p106
      %p108 = scmp.le.s32.totalorder 1, %s18
      %p109 = scmp.lt.s32.totalorder %s18, 3
      %p110 = pnand %p108, %p109
      %p111 = pneg %p110
      // Predicated region
      $region9: #{tpu_custom_call.1} parent=5 // pred_check
        _
      $region10: #{tpu_custom_call.1} parent=5 // pred_check_branch
        %113 = sbr.rel (%p110) target = $region12
      $region11: #{tpu_custom_call.1} parent=5 // pred_region
        %s114 = ssub.s32 %s18, 1
        // Predicated region
        $region13: #{tpu_custom_call.1} parent=11 // pred_check
          %p115 = pneg %p51
        $region14: #{tpu_custom_call.1} parent=11 // pred_check_branch
          %117 = sbr.rel (%p115) target = $region16
        $region15: #{tpu_custom_call.1} parent=11 // pred_region
          _
        $region16: #{tpu_custom_call.1} parent=11 // pred_fallthru
          _
        // Predicated region
        $region17: #{tpu_custom_call.1} parent=11 // pred_check
          %p118 = pneg %p72
        $region18: #{tpu_custom_call.1} parent=11 // pred_check_branch
          %120 = sbr.rel (%p118) target = $region20
        $region19: #{tpu_custom_call.1} parent=11 // pred_region
          _
        $region20: #{tpu_custom_call.1} parent=11 // pred_fallthru
          _
      $region12: #{tpu_custom_call.1} parent=5 // pred_fallthru
        _
      %p121 = scmp.lt.s32.totalorder %s18, 2
      // Predicated region
      $region21: #{tpu_custom_call.1} parent=5 // pred_check
        %p122 = pneg %p121
      $region22: #{tpu_custom_call.1} parent=5 // pred_check_branch
        %124 = sbr.rel (%p122) target = $region24
      $region23: #{tpu_custom_call.1} parent=5 // pred_region
        _
      $region24: #{tpu_custom_call.1} parent=5 // pred_fallthru
        _
      %p125 = scmp.le.s32.totalorder 1, %s18
      %p126 = scmp.lt.s32.totalorder %s18, 3
      %p127 = pnand %p125, %p126
      %p128 = pneg %p127
      // Predicated region
      $region25: #{tpu_custom_call.1} parent=5 // pred_check
        _
      $region26: #{tpu_custom_call.1} parent=5 // pred_check_branch
        %130 = sbr.rel (%p127) target = $region28
      $region27: #{tpu_custom_call.1} parent=5 // pred_region
        %s131 = ssub.s32 %s18, 1
        %p132 = pneg %p51
        %p133 = pneg %p48
        %p134 = pneg %p72
        %p135 = pneg %p69
        %p136 = pneg %p100
        %p137 = pneg %p97
        %s138 = sand.u32 %s87, 1
        %s139 = scalar_lea.sflag [#allocation5], %s138
        %s140 = sand.u32 %s87, 1
        %s141 = smul.addr %s140, 8
        %s142 = scalar_lea.vmem [#allocation4], %s141
        %s143 = smul.u32 %s28, 8
        %s144 = smul.u32 %s27, 8
        %s145 = sadd.s32 %s143, %s144
        %s146 = sld [smem:[#allocation3 + %s145]]
        %s147 = scalar_lea.vmem %s1, %s146
        %v148 = vld [vmem:[%s147] sm:$0x1]
        %vm149 = vcmask 253952
        %150 = vst.msk [vmem:[%s142] sm:$0x1] %vm149, %v148
        %s151 = sadd.s32 %s145, 1
        %s152 = sld [smem:[#allocation3 + %s151]]
        %s153 = scalar_lea.vmem %s1, %s152
        %v154 = vld [vmem:[%s153] sm:$0x1]
        %155 = vst.msk [vmem:[%s142 + $0x1] sm:$0x1] %vm149, %v154
        %s156 = sadd.s32 %s145, 2
        %s157 = sld [smem:[#allocation3 + %s156]]
        %s158 = scalar_lea.vmem %s1, %s157
        %v159 = vld [vmem:[%s158] sm:$0x1]
        %160 = vst.msk [vmem:[%s142 + $0x2] sm:$0x1] %vm149, %v159
        %s161 = sadd.s32 %s145, 3
        %s162 = sld [smem:[#allocation3 + %s161]]
        %s163 = scalar_lea.vmem %s1, %s162
        %v164 = vld [vmem:[%s163] sm:$0x1]
        %165 = vst.msk [vmem:[%s142 + $0x3] sm:$0x1] %vm149, %v164
        %s166 = sadd.s32 %s145, 4
        %s167 = sld [smem:[#allocation3 + %s166]]
        %s168 = scalar_lea.vmem %s1, %s167
        %v169 = vld [vmem:[%s168] sm:$0x1]
        %170 = vst.msk [vmem:[%s142 + $0x4] sm:$0x1] %vm149, %v169
        %s171 = sadd.s32 %s145, 5
        %s172 = sld [smem:[#allocation3 + %s171]]
        %s173 = scalar_lea.vmem %s1, %s172
        %v174 = vld [vmem:[%s173] sm:$0x1]
        %175 = vst.msk [vmem:[%s142 + $0x5] sm:$0x1] %vm149, %v174
        %s176 = sadd.s32 %s145, 6
        %s177 = sld [smem:[#allocation3 + %s176]]
        %s178 = scalar_lea.vmem %s1, %s177
        %v179 = vld [vmem:[%s178] sm:$0x1]
        %180 = vst.msk [vmem:[%s142 + $0x6] sm:$0x1] %vm149, %v179
        %s181 = sadd.s32 %s145, 7
        %s182 = sld [smem:[#allocation3 + %s181]]
        %s183 = scalar_lea.vmem %s1, %s182
        %v184 = vld [vmem:[%s183] sm:$0x1]
        %185 = vst.msk [vmem:[%s142 + $0x7] sm:$0x1] %vm149, %v184
        %v186 = vld [vmem:[%s142] sm:$0xff]
        %s187 = scalar_lea.vmem %s2, %s144
        %v188 = vld [vmem:[%s187] sm:$0xff]
        %v189 = vadd.f32 %v186, %v188
        %vm190 = vcmask 261120
        %191 = vst.msk [vmem:[%s142] sm:$0xff] %vm190, %v189
        %s192 = sand.u32 %s87, 1
        %s193 = scalar_lea.sflag [#allocation5], %s192
        %s194 = sand.u32 %s87, 1
        %s195 = smul.addr %s194, 8
        %s196 = scalar_lea.vmem [#allocation4], %s195
        // Predicated region
        $region29: #{tpu_custom_call.1} parent=27 // pred_check
          %p197 = pneg %p97
        $region30: #{tpu_custom_call.1} parent=27 // pred_check_branch
          %199 = sbr.rel (%p197) target = $region32
        $region31: #{tpu_custom_call.1} parent=27 // pred_region
          %s201 = ssub.s32 128, 128
          %202 = vsyncadd %s193, %s201
          %s203 = sadd.s32 %s27, %s28
          %s204 = smul.addr %s203, 128
          %s205 = scalar_lea.hbm %s3, %s204
          %s207 = sshll.u32 %s196, 4
          %s208 = int_to_ptr.vmem [resolvable:$true] %s207
          %210 = dma.vmem_to_hbm [thread:$0]  %s208, 128, %s205, %s193
        $region32: #{tpu_custom_call.1} parent=27 // pred_fallthru
          _
      $region28: #{tpu_custom_call.1} parent=5 // pred_fallthru
        _
      %p211 = scmp.le.s32.totalorder 2, %s18
      // Predicated region
      $region33: #{tpu_custom_call.1} parent=5 // pred_check
        %p212 = pneg %p211
      $region34: #{tpu_custom_call.1} parent=5 // pred_check_branch
        %214 = sbr.rel (%p212) target = $region36
      $region35: #{tpu_custom_call.1} parent=5 // pred_region
        %s215 = ssub.s32 %s18, 2
        // Predicated region
        $region37: #{tpu_custom_call.1} parent=35 // pred_check
          %p216 = pneg %p103
        $region38: #{tpu_custom_call.1} parent=35 // pred_check_branch
          %218 = sbr.rel (%p216) target = $region40
        $region39: #{tpu_custom_call.1} parent=35 // pred_region
          %s219 = sand.u32 %s88, 1
          %s220 = scalar_lea.sflag [#allocation5], %s219
          %s221 = sand.u32 %s88, 1
          %s222 = smul.addr %s221, 8
          %s223 = scalar_lea.vmem [#allocation4], %s222
          %224 = dma.done %s220, 128
        $region40: #{tpu_custom_call.1} parent=35 // pred_fallthru
          _
      $region36: #{tpu_custom_call.1} parent=5 // pred_fallthru
        _
    $region6: #{tpu_custom_call.1} parent=1 // loop_footer
      %s22 = sadd.s32 1, %s18
    $region7: #{tpu_custom_call.1} parent=1 // loop_footer_branch
      %17 = sbr.rel target = $region3
    $region8: #{tpu_custom_call.1} parent=1 // loop_exit
      _
    %225 = vsyncpa [#allocation5], 1
    %s226 = scalar_lea.sflag [#allocation5], 1
    %227 = vsyncpa %s226, 1

</llo_original>
